<compile_context>
chip_gen: v7x
topology: tpu7x:2x2x1
jax: 0.10.0
libtpu: 0.0.40
codegen_flags: <defaults>
</compile_context>

<pallas_src>
import functools

import jax
import jax.numpy as jnp
from jax.experimental import pallas as pl
from jax.experimental.pallas import tpu as pltpu


def _round_up(v: int, m: int) -> int:
    return (v + m - 1) // m * m


def _make_branch_gcn_kernel(num_gcn: int, compute_dtype):
    """Kernel closure with the (static) number of GCN layers baked in."""

    def kernel(x_ref, w0_ref, b0_ref, wg_ref, bg_ref, o_ref):
        # init_fc + relu. x stays in its HBM dtype (e.g. f32); the cast to the MXU
        # compute dtype happens on the VMEM tile. Accumulation is always f32.
        x = x_ref[...].astype(compute_dtype)
        h = jnp.dot(x, w0_ref[...], preferred_element_type=jnp.float32)
        h = jnp.maximum(h + b0_ref[...], 0.0)

        # GCN residual blocks (num_gcn is small & static -> unrolled Python loop).
        for layer in range(num_gcn):
            out = jnp.dot(h.astype(compute_dtype), wg_ref[layer],
                          preferred_element_type=jnp.float32) + bg_ref[layer]
            h = jnp.maximum(out + h, 0.0)

        o_ref[...] = h.astype(o_ref.dtype)

    return kernel


def _select_batch_tiling(B: int, max_batch_tile: int):
    """Pick (Bt, Bp): batch tile + padded batch, guaranteeing >= 2 grid steps."""
    max_batch_tile = max(8, _round_up(max_batch_tile, 8))
    half = -(-B // 2)                 # ~half the batch per tile -> both v7x TCs get work
    if half >= 128:
        bt = _round_up(half, 128)     # MXU M granularity
    else:
        bt = _round_up(half, 8)       # sublane granularity
    bt = min(bt, max_batch_tile)
    bp = _round_up(B, bt)
    if bp // bt < 2:                  # keep pipelining / megacore sharding alive
        bp = 2 * bt
    return bt, bp


@functools.partial(
    jax.jit,
    static_argnames=("num_gcn", "max_batch_tile", "use_bf16", "out_dtype", "crop"))
def branch_gcn_forward(x, w0_t, b0, wg_t, bg, *, num_gcn, max_batch_tile=512,
                       use_bf16=True, out_dtype=jnp.float32, crop=True):
    """x: (B, in_dim); w0_t: (in_dim, n_nodes); b0: (n_nodes,) or (1, n_nodes);
    wg_t: (num_gcn, n_nodes, n_nodes); bg: (num_gcn, n_nodes) or (num_gcn, 1, n_nodes).
    Weights are pre-transposed to (in, out) so the kernel computes x @ W directly."""
    B, in_dim = x.shape
    n_nodes = w0_t.shape[1]

    b0 = b0.reshape(1, n_nodes)
    bg = bg.reshape(num_gcn, 1, n_nodes)

    N = _round_up(n_nodes, 128)                       # lane-dense output / weight columns
    compute_dtype = jnp.bfloat16 if use_bf16 else jnp.float32

    Bt, Bp = _select_batch_tiling(B, max_batch_tile)

    # Only the batch dim is (possibly) padded; the contraction dim stays un-padded
    # (block dim == full in_dim is legal, Mosaic handles the internal layout pad).
    x_in = jnp.pad(x, ((0, Bp - B), (0, 0))) if Bp != B else x

    # Weights / biases are tiny relative to x -> one-time wrapper pad + cast is cheap.
    w0_p = jnp.pad(w0_t, ((0, 0), (0, N - n_nodes))).astype(compute_dtype)
    b0_p = jnp.pad(b0, ((0, 0), (0, N - n_nodes))).astype(jnp.float32)
    wg_p = jnp.pad(wg_t, ((0, 0), (0, N - n_nodes), (0, N - n_nodes))).astype(compute_dtype)
    bg_p = jnp.pad(bg, ((0, 0), (0, 0), (0, N - n_nodes))).astype(jnp.float32)

    x_item = jnp.dtype(x.dtype).itemsize
    w_item = jnp.dtype(compute_dtype).itemsize
    o_item = jnp.dtype(out_dtype).itemsize

    # Double-buffered x / out tiles + VMEM-resident weights & biases.
    vmem_bytes = (2 * Bt * in_dim * x_item + 2 * Bt * N * o_item
                  + (in_dim * N + num_gcn * N * N) * w_item
                  + (1 + num_gcn) * N * 4)
    vmem_limit = int(min(max(1.3 * vmem_bytes + (2 << 20), 32 << 20), 96 << 20))

    flops = 2 * Bp * (in_dim * N + num_gcn * N * N)
    bytes_accessed = int(Bp * in_dim * x_item + Bp * N * o_item
                         + (in_dim * N + num_gcn * N * N) * w_item
                         + (1 + num_gcn) * N * 4)

    out = pl.pallas_call(
        _make_branch_gcn_kernel(num_gcn, compute_dtype),
        out_shape=jax.ShapeDtypeStruct((Bp, N), out_dtype),
        grid=(Bp // Bt,),
        in_specs=[
            pl.BlockSpec((Bt, in_dim), lambda i: (i, 0)),          # x tile (pipelined)
            pl.BlockSpec((in_dim, N), lambda i: (0, 0)),           # w0 (VMEM-resident)
            pl.BlockSpec((1, N), lambda i: (0, 0)),                # b0
            pl.BlockSpec((num_gcn, N, N), lambda i: (0, 0, 0)),    # stacked GCN weights
            pl.BlockSpec((num_gcn, 1, N), lambda i: (0, 0, 0)),    # stacked GCN biases
        ],
        out_specs=pl.BlockSpec((Bt, N), lambda i: (i, 0)),
        compiler_params=pltpu.CompilerParams(
            dimension_semantics=("parallel",),
            vmem_limit_bytes=vmem_limit,
            # Let XLA fuse the (optional) batch pad into the pallas_call x operand so
            # no padded copy of x is materialized in HBM.
            allow_input_fusion=[True, False, False, False, False],
        ),
        cost_estimate=pl.CostEstimate(
            flops=flops, transcendentals=0, bytes_accessed=bytes_accessed),
    )(x_in, w0_p, b0_p, wg_p, bg_p)

    if crop:
        # Eager crop (matches the PyTorch output shape). Pass crop=False to get the
        # padded (Bp, N) lane-dense buffer and crop lazily downstream.
        return out[:B, :n_nodes]
    return out


def reference_forward(x, w0_t, b0, wg_t, bg, num_gcn):
    h = jnp.maximum(x @ w0_t + b0.reshape(1, -1), 0.0)
    for layer in range(num_gcn):
        out = h @ wg_t[layer] + bg[layer].reshape(1, -1)
        h = jnp.maximum(out + h, 0.0)
    return h


if __name__ == "__main__":
    # Small shapes consistent with the module structure (module defaults are
    # in_dim=68*68, n_nodes=68, num_gcn=3; scaled down for a quick test).
    batch, in_dim, n_nodes, num_gcn = 8, 64, 32, 3

    key = jax.random.PRNGKey(0)
    kx, kw0, kb0, kwg, kbg = jax.random.split(key, 5)

    x = jax.random.normal(kx, (batch, in_dim), dtype=jnp.float32)

    # PyTorch stores Linear weight as (out, in); we keep them pre-transposed to (in, out)
    # so the kernel computes x @ W directly.
    w0_t = jax.random.normal(kw0, (in_dim, n_nodes), dtype=jnp.float32) * 0.05
    b0 = jax.random.normal(kb0, (1, n_nodes), dtype=jnp.float32) * 0.05
    wg_t = jax.random.normal(kwg, (num_gcn, n_nodes, n_nodes), dtype=jnp.float32) * 0.05
    bg = jax.random.normal(kbg, (num_gcn, 1, n_nodes), dtype=jnp.float32) * 0.05

    ref = reference_forward(x, w0_t, b0, wg_t, bg, num_gcn)

    # Exact-path check (f32 MXU inputs) against the JAX reference.
    out_f32 = branch_gcn_forward(x, w0_t, b0, wg_t, bg, num_gcn=num_gcn, use_bf16=False)
    out_f32 = jax.block_until_ready(out_f32)
    assert out_f32.shape == (batch, n_nodes)
    assert jnp.allclose(out_f32, ref, atol=1e-3, rtol=1e-3), "f32 kernel mismatch vs reference"

    # Performance path (bf16 MXU inputs cast in-kernel, f32 accumulation) — relaxed tolerance.
    out_bf16 = branch_gcn_forward(x, w0_t, b0, wg_t, bg, num_gcn=num_gcn, use_bf16=True)
    out_bf16 = jax.block_until_ready(out_bf16)
    assert out_bf16.shape == (batch, n_nodes)
    assert jnp.allclose(out_bf16, ref, atol=3e-2, rtol=3e-2), "bf16 kernel mismatch vs reference"

    print("KERNEL_OK")
</pallas_src>

<mosaic_0001>
module attributes {stable_mosaic.version = 11 : i64} {
  func.func @kernel(%arg0: i32, %arg1: memref<8x64xf32, #tpu.memory_space<vmem>>, %arg2: memref<64x128xf32, #tpu.memory_space<vmem>>, %arg3: memref<1x128xf32, #tpu.memory_space<vmem>>, %arg4: memref<3x128x128xf32, #tpu.memory_space<vmem>>, %arg5: memref<3x1x128xf32, #tpu.memory_space<vmem>>, %arg6: memref<8x128xf32, #tpu.memory_space<vmem>>) attributes {dimension_semantics = [#tpu.dimension_semantics<parallel>], iteration_bounds = array<i64: 2>, scalar_prefetch = 0 : i64, scratch_operands = 0 : i64, tpu.core_type = #tpu.core_type<tc>, window_params = [{transform_indices = @transform_0, window_bounds = array<i64: 8, 64>}, {pipeline_mode = #tpu.pipeline_mode<synchronous>, transform_indices = @transform_1, window_bounds = array<i64: 64, 128>}, {pipeline_mode = #tpu.pipeline_mode<synchronous>, transform_indices = @transform_2, window_bounds = array<i64: 1, 128>}, {pipeline_mode = #tpu.pipeline_mode<synchronous>, transform_indices = @transform_3, window_bounds = array<i64: 3, 128, 128>}, {pipeline_mode = #tpu.pipeline_mode<synchronous>, transform_indices = @transform_4, window_bounds = array<i64: 3, 1, 128>}, {transform_indices = @transform_5, window_bounds = array<i64: 8, 128>}]} {
    %c0 = arith.constant 0 : index
    %c0_0 = arith.constant 0 : index
    %0 = vector.load %arg1[%c0, %c0_0] : memref<8x64xf32, #tpu.memory_space<vmem>>, vector<8x64xf32>
    %c0_1 = arith.constant 0 : index
    %c0_2 = arith.constant 0 : index
    %1 = vector.load %arg2[%c0_1, %c0_2] : memref<64x128xf32, #tpu.memory_space<vmem>>, vector<64x128xf32>
    %cst = arith.constant dense<0.000000e+00> : vector<8x128xf32>
    %2 = tpu.matmul %0, %1, %cst {dimension_numbers = #tpu.dot_dimension_numbers<[1], [0], [0], [1], [0, 0, 1, 1], [], []>} : vector<8x64xf32>, vector<64x128xf32>, vector<8x128xf32> -> vector<8x128xf32>
    %c0_3 = arith.constant 0 : index
    %c0_4 = arith.constant 0 : index
    %3 = vector.load %arg3[%c0_3, %c0_4] : memref<1x128xf32, #tpu.memory_space<vmem>>, vector<1x128xf32>
    %4 = vector.broadcast %3 : vector<1x128xf32> to vector<8x128xf32>
    %5 = arith.addf %2, %4 : vector<8x128xf32>
    %cst_5 = arith.constant 0.000000e+00 : f32
    %6 = vector.broadcast %cst_5 : f32 to vector<8x128xf32>
    %7 = arith.maximumf %5, %6 : vector<8x128xf32>
    %c0_6 = arith.constant 0 : index
    %c0_7 = arith.constant 0 : index
    %c0_8 = arith.constant 0 : index
    %8 = vector.load %arg4[%c0_6, %c0_7, %c0_8] : memref<3x128x128xf32, #tpu.memory_space<vmem>>, vector<1x128x128xf32>
    %9 = vector.shape_cast %8 : vector<1x128x128xf32> to vector<128x128xf32>
    %cst_9 = arith.constant dense<0.000000e+00> : vector<8x128xf32>
    %10 = tpu.matmul %7, %9, %cst_9 {dimension_numbers = #tpu.dot_dimension_numbers<[1], [0], [0], [1], [0, 0, 1, 1], [], []>} : vector<8x128xf32>, vector<128x128xf32>, vector<8x128xf32> -> vector<8x128xf32>
    %c0_10 = arith.constant 0 : index
    %c0_11 = arith.constant 0 : index
    %c0_12 = arith.constant 0 : index
    %11 = vector.load %arg5[%c0_10, %c0_11, %c0_12] : memref<3x1x128xf32, #tpu.memory_space<vmem>>, vector<1x1x128xf32>
    %12 = vector.shape_cast %11 : vector<1x1x128xf32> to vector<1x128xf32>
    %13 = vector.broadcast %12 : vector<1x128xf32> to vector<8x128xf32>
    %14 = arith.addf %10, %13 : vector<8x128xf32>
    %15 = arith.addf %14, %7 : vector<8x128xf32>
    %cst_13 = arith.constant 0.000000e+00 : f32
    %16 = vector.broadcast %cst_13 : f32 to vector<8x128xf32>
    %17 = arith.maximumf %15, %16 : vector<8x128xf32>
    %c1 = arith.constant 1 : index
    %c0_14 = arith.constant 0 : index
    %c0_15 = arith.constant 0 : index
    %18 = vector.load %arg4[%c1, %c0_14, %c0_15] : memref<3x128x128xf32, #tpu.memory_space<vmem>>, vector<1x128x128xf32>
    %19 = vector.shape_cast %18 : vector<1x128x128xf32> to vector<128x128xf32>
    %cst_16 = arith.constant dense<0.000000e+00> : vector<8x128xf32>
    %20 = tpu.matmul %17, %19, %cst_16 {dimension_numbers = #tpu.dot_dimension_numbers<[1], [0], [0], [1], [0, 0, 1, 1], [], []>} : vector<8x128xf32>, vector<128x128xf32>, vector<8x128xf32> -> vector<8x128xf32>
    %c1_17 = arith.constant 1 : index
    %c0_18 = arith.constant 0 : index
    %c0_19 = arith.constant 0 : index
    %21 = vector.load %arg5[%c1_17, %c0_18, %c0_19] : memref<3x1x128xf32, #tpu.memory_space<vmem>>, vector<1x1x128xf32>
    %22 = vector.shape_cast %21 : vector<1x1x128xf32> to vector<1x128xf32>
    %23 = vector.broadcast %22 : vector<1x128xf32> to vector<8x128xf32>
    %24 = arith.addf %20, %23 : vector<8x128xf32>
    %25 = arith.addf %24, %17 : vector<8x128xf32>
    %cst_20 = arith.constant 0.000000e+00 : f32
    %26 = vector.broadcast %cst_20 : f32 to vector<8x128xf32>
    %27 = arith.maximumf %25, %26 : vector<8x128xf32>
    %c2 = arith.constant 2 : index
    %c0_21 = arith.constant 0 : index
    %c0_22 = arith.constant 0 : index
    %28 = vector.load %arg4[%c2, %c0_21, %c0_22] : memref<3x128x128xf32, #tpu.memory_space<vmem>>, vector<1x128x128xf32>
    %29 = vector.shape_cast %28 : vector<1x128x128xf32> to vector<128x128xf32>
    %cst_23 = arith.constant dense<0.000000e+00> : vector<8x128xf32>
    %30 = tpu.matmul %27, %29, %cst_23 {dimension_numbers = #tpu.dot_dimension_numbers<[1], [0], [0], [1], [0, 0, 1, 1], [], []>} : vector<8x128xf32>, vector<128x128xf32>, vector<8x128xf32> -> vector<8x128xf32>
    %c2_24 = arith.constant 2 : index
    %c0_25 = arith.constant 0 : index
    %c0_26 = arith.constant 0 : index
    %31 = vector.load %arg5[%c2_24, %c0_25, %c0_26] : memref<3x1x128xf32, #tpu.memory_space<vmem>>, vector<1x1x128xf32>
    %32 = vector.shape_cast %31 : vector<1x1x128xf32> to vector<1x128xf32>
    %33 = vector.broadcast %32 : vector<1x128xf32> to vector<8x128xf32>
    %34 = arith.addf %30, %33 : vector<8x128xf32>
    %35 = arith.addf %34, %27 : vector<8x128xf32>
    %cst_27 = arith.constant 0.000000e+00 : f32
    %36 = vector.broadcast %cst_27 : f32 to vector<8x128xf32>
    %37 = arith.maximumf %35, %36 : vector<8x128xf32>
    %c0_28 = arith.constant 0 : index
    %c0_29 = arith.constant 0 : index
    %38 = vector.load %arg6[%c0_28, %c0_29] : memref<8x128xf32, #tpu.memory_space<vmem>>, vector<8x128xf32>
    tpu.vector_store %arg6[%c0_28, %c0_29], %37 {strides = array<i32>} : memref<8x128xf32, #tpu.memory_space<vmem>>, vector<8x128xf32>,
    return
  }
  func.func @transform_0(%arg0: i32) -> (i32, i32) {
    %c0_i32 = arith.constant 0 : i32
    %c0_i32_0 = arith.constant 0 : i32
    return %arg0, %c0_i32 : i32, i32
  }
  func.func @transform_1(%arg0: i32) -> (i32, i32) {
    %c0_i32 = arith.constant 0 : i32
    %c0_i32_0 = arith.constant 0 : i32
    %c0_i32_1 = arith.constant 0 : i32
    return %c0_i32, %c0_i32_0 : i32, i32
  }
  func.func @transform_2(%arg0: i32) -> (i32, i32) {
    %c0_i32 = arith.constant 0 : i32
    %c0_i32_0 = arith.constant 0 : i32
    %c0_i32_1 = arith.constant 0 : i32
    return %c0_i32, %c0_i32_0 : i32, i32
  }
  func.func @transform_3(%arg0: i32) -> (i32, i32, i32) {
    %c0_i32 = arith.constant 0 : i32
    %c0_i32_0 = arith.constant 0 : i32
    %c0_i32_1 = arith.constant 0 : i32
    %c0_i32_2 = arith.constant 0 : i32
    return %c0_i32, %c0_i32_0, %c0_i32_1 : i32, i32, i32
  }
  func.func @transform_4(%arg0: i32) -> (i32, i32, i32) {
    %c0_i32 = arith.constant 0 : i32
    %c0_i32_0 = arith.constant 0 : i32
    %c0_i32_1 = arith.constant 0 : i32
    %c0_i32_2 = arith.constant 0 : i32
    return %c0_i32, %c0_i32_0, %c0_i32_1 : i32, i32, i32
  }
  func.func @transform_5(%arg0: i32) -> (i32, i32) {
    %c0_i32 = arith.constant 0 : i32
    %c0_i32_0 = arith.constant 0 : i32
    return %arg0, %c0_i32 : i32, i32
  }
}

</mosaic_0001>

<llo_original>
// kernel: branch_gcn_forward.2
$region0: #{branch_gcn_forward.2}
  #allocation0 [shape = 'u32[]', space=smem, size = 0x4, offset = 0x4, fixed_abs, tag = 'smem constant byte address 0x4 - core index']
  #allocation1 [shape = 'u32[144,128]{1,0:T(1,128)}', space=vmem, size = 0x12000, scoped, tag = 'internal scratch']
  #allocation2 [shape = 'u32[2048]{0}', space=vmem, size = 0x2000, scoped, tag = 'scoped memory for branch_gcn_forward.2']
  #allocation3 [shape = 'u32[2048]{0}', space=vmem, size = 0x2000, scoped, tag = 'scoped memory for branch_gcn_forward.2']
  #allocation4 [shape = 'u32[2048]{0}', space=vmem, size = 0x2000, scoped, tag = 'scoped memory for branch_gcn_forward.2']
  #allocation5 [shape = 'u32[2048]{0}', space=vmem, size = 0x2000, scoped, tag = 'scoped memory for branch_gcn_forward.2']
  #allocation6 [shape = 'u32[2048]{0}', space=vmem, size = 0x2000, scoped, tag = 'scoped memory for branch_gcn_forward.2']
  %s0 = inlined_call_operand.vmem [shape: f32[64,128], index: 0, kind: input, shape index: {}]
  %s1 = inlined_call_operand.vmem [shape: f32[1,128], index: 1, kind: input, shape index: {}]
  %s2 = inlined_call_operand.vmem [shape: f32[3,128,128], index: 2, kind: input, shape index: {}]
  %s3 = inlined_call_operand.vmem [shape: f32[3,1,128], index: 3, kind: input, shape index: {}]
  %s4 = inlined_call_operand.vmem [shape: f32[8,64], index: 4, kind: input, shape index: {}]
  %s5 = inlined_call_operand.<no memory space> [shape: f32[], index: 5, kind: input, shape index: {}]
  %s6 = inlined_call_operand.vmem [shape: f32[16,128], index: 6, kind: output, shape index: {}]
  %s7 = sld [smem:[#allocation0]]
  $region53: #{branch_gcn_forward.2} parent=0
    _
  %s9 = ssub.s32 1, %s7
  %s10 = scalar_select 0, %s9, %s7
  %v11 = vstv %s5
  loop: start=0, step=1, limit=4
  $region2: #{branch_gcn_forward.2} parent=0 // loop_pre_header
    _
  $region3: #{branch_gcn_forward.2} parent=0 // loop_header
    %s13 = sphi 0, %s17
    %p14 = scmp.ge.s32.totalorder %s13, 4
    %s23 = sphi 0, %s25
    %s26 = sphi 0, %s23
    %s27 = sphi 0, %s26
    %s43 = sphi 0, %s27
    %s47 = sphi 0, %s47
    %s49 = sphi 0, %s47
    %s50 = sphi 0, %s49
    %s64 = sphi 0, %s50
    %s68 = sphi 0, %s68
    %s70 = sphi 0, %s68
    %s71 = sphi 0, %s70
    %s85 = sphi 0, %s71
    %s89 = sphi 0, %s89
    %s91 = sphi 0, %s89
    %s92 = sphi 0, %s91
    %s106 = sphi 0, %s92
    %s110 = sphi 0, %s110
    %s112 = sphi 0, %s110
    %s113 = sphi 0, %s112
    %s127 = sphi 0, %s113
    %s133 = sphi 0, %s135
    %s136 = sphi 0, %s133
    %s137 = sphi 0, %s136
    %s153 = sphi 0, %s137
  $region4: #{branch_gcn_forward.2} parent=0 // loop_header_branch
    %16 = sbr.rel (%p14) target = $region8
  $region5: #{branch_gcn_forward.2} parent=0 // loop_body
    %s18 = ssub.s32 %s13, 1
    %s19 = ssub.s32 %s13, 2
    %s20 = sadd.s32 %s13, 1
    %s21 = ssub.s32 %s13, %s20
    %p22 = scmp.eq.s32.totalorder %s21, 0
    %s24 = sadd.s32 %s23, 1
    %s25 = scalar_select %p22, %s23, %s24
    %p28 = pneg %p22
    %p29 = scmp.eq.s32.totalorder %s13, 1
    %p30 = por %p28, %p29
    %p31 = scmp.ne.s32.totalorder %s23, %s26
    %p32 = scmp.eq.s32.totalorder %s13, 0
    %p33 = por %p31, %p32
    %p34 = scmp.ne.s32.totalorder %s23, %s26
    %p35 = scmp.eq.s32.totalorder %s18, 1
    %p36 = por %p34, %p35
    %p37 = scmp.ne.s32.totalorder %s26, %s27
    %p38 = scmp.eq.s32.totalorder %s18, 0
    %p39 = por %p37, %p38
    %p40 = scmp.ne.s32.totalorder %s26, %s27
    %p41 = scmp.eq.s32.totalorder %s19, 1
    %p42 = por %p40, %p41
    %p44 = scmp.ne.s32.totalorder %s27, %s43
    %p45 = scmp.eq.s32.totalorder %s19, 0
    %p46 = por %p44, %p45
    %s48 = sadd.s32 %s47, 1
    %p51 = scmp.eq.s32.totalorder %s13, 1
    %p52 = scmp.ne.s32.totalorder %s47, %s49
    %p53 = scmp.eq.s32.totalorder %s13, 0
    %p54 = por %p52, %p53
    %p55 = scmp.ne.s32.totalorder %s47, %s49
    %p56 = scmp.eq.s32.totalorder %s18, 1
    %p57 = por %p55, %p56
    %p58 = scmp.ne.s32.totalorder %s49, %s50
    %p59 = scmp.eq.s32.totalorder %s18, 0
    %p60 = por %p58, %p59
    %p61 = scmp.ne.s32.totalorder %s49, %s50
    %p62 = scmp.eq.s32.totalorder %s19, 1
    %p63 = por %p61, %p62
    %p65 = scmp.ne.s32.totalorder %s50, %s64
    %p66 = scmp.eq.s32.totalorder %s19, 0
    %p67 = por %p65, %p66
    %s69 = sadd.s32 %s68, 1
    %p72 = scmp.eq.s32.totalorder %s13, 1
    %p73 = scmp.ne.s32.totalorder %s68, %s70
    %p74 = scmp.eq.s32.totalorder %s13, 0
    %p75 = por %p73, %p74
    %p76 = scmp.ne.s32.totalorder %s68, %s70
    %p77 = scmp.eq.s32.totalorder %s18, 1
    %p78 = por %p76, %p77
    %p79 = scmp.ne.s32.totalorder %s70, %s71
    %p80 = scmp.eq.s32.totalorder %s18, 0
    %p81 = por %p79, %p80
    %p82 = scmp.ne.s32.totalorder %s70, %s71
    %p83 = scmp.eq.s32.totalorder %s19, 1
    %p84 = por %p82, %p83
    %p86 = scmp.ne.s32.totalorder %s71, %s85
    %p87 = scmp.eq.s32.totalorder %s19, 0
    %p88 = por %p86, %p87
    %s90 = sadd.s32 %s89, 1
    %p93 = scmp.eq.s32.totalorder %s13, 1
    %p94 = scmp.ne.s32.totalorder %s89, %s91
    %p95 = scmp.eq.s32.totalorder %s13, 0
    %p96 = por %p94, %p95
    %p97 = scmp.ne.s32.totalorder %s89, %s91
    %p98 = scmp.eq.s32.totalorder %s18, 1
    %p99 = por %p97, %p98
    %p100 = scmp.ne.s32.totalorder %s91, %s92
    %p101 = scmp.eq.s32.totalorder %s18, 0
    %p102 = por %p100, %p101
    %p103 = scmp.ne.s32.totalorder %s91, %s92
    %p104 = scmp.eq.s32.totalorder %s19, 1
    %p105 = por %p103, %p104
    %p107 = scmp.ne.s32.totalorder %s92, %s106
    %p108 = scmp.eq.s32.totalorder %s19, 0
    %p109 = por %p107, %p108
    %s111 = sadd.s32 %s110, 1
    %p114 = scmp.eq.s32.totalorder %s13, 1
    %p115 = scmp.ne.s32.totalorder %s110, %s112
    %p116 = scmp.eq.s32.totalorder %s13, 0
    %p117 = por %p115, %p116
    %p118 = scmp.ne.s32.totalorder %s110, %s112
    %p119 = scmp.eq.s32.totalorder %s18, 1
    %p120 = por %p118, %p119
    %p121 = scmp.ne.s32.totalorder %s112, %s113
    %p122 = scmp.eq.s32.totalorder %s18, 0
    %p123 = por %p121, %p122
    %p124 = scmp.ne.s32.totalorder %s112, %s113
    %p125 = scmp.eq.s32.totalorder %s19, 1
    %p126 = por %p124, %p125
    %p128 = scmp.ne.s32.totalorder %s113, %s127
    %p129 = scmp.eq.s32.totalorder %s19, 0
    %p130 = por %p128, %p129
    %s131 = ssub.s32 %s13, %s20
    %p132 = scmp.eq.s32.totalorder %s131, 0
    %s134 = sadd.s32 %s133, 1
    %s135 = scalar_select %p132, %s133, %s134
    %p138 = pneg %p132
    %p139 = scmp.eq.s32.totalorder %s13, 1
    %p140 = por %p138, %p139
    %p141 = scmp.ne.s32.totalorder %s133, %s136
    %p142 = scmp.eq.s32.totalorder %s13, 0
    %p143 = por %p141, %p142
    %p144 = scmp.ne.s32.totalorder %s133, %s136
    %p145 = scmp.eq.s32.totalorder %s18, 1
    %p146 = por %p144, %p145
    %p147 = scmp.ne.s32.totalorder %s136, %s137
    %p148 = scmp.eq.s32.totalorder %s18, 0
    %p149 = por %p147, %p148
    %p150 = scmp.ne.s32.totalorder %s136, %s137
    %p151 = scmp.eq.s32.totalorder %s19, 1
    %p152 = por %p150, %p151
    %p154 = scmp.ne.s32.totalorder %s137, %s153
    %p155 = scmp.eq.s32.totalorder %s19, 0
    %p156 = por %p154, %p155
    %p157 = scmp.le.s32.totalorder 1, %s13
    %p158 = scmp.lt.s32.totalorder %s13, 3
    %p159 = pnand %p157, %p158
    %p160 = pneg %p159
    // Predicated region
    $region9: #{branch_gcn_forward.2} parent=5 // pred_check
      _
    $region10: #{branch_gcn_forward.2} parent=5 // pred_check_branch
      %162 = sbr.rel (%p159) target = $region12
    $region11: #{branch_gcn_forward.2} parent=5 // pred_region
      %s163 = ssub.s32 %s13, 1
      // Predicated region
      $region13: #{branch_gcn_forward.2} parent=11 // pred_check
        %p164 = pneg %p60
      $region14: #{branch_gcn_forward.2} parent=11 // pred_check_branch
        %166 = sbr.rel (%p164) target = $region16
      $region15: #{branch_gcn_forward.2} parent=11 // pred_region
        _
      $region16: #{branch_gcn_forward.2} parent=11 // pred_fallthru
        _
      // Predicated region
      $region17: #{branch_gcn_forward.2} parent=11 // pred_check
        %p167 = pneg %p81
      $region18: #{branch_gcn_forward.2} parent=11 // pred_check_branch
        %169 = sbr.rel (%p167) target = $region20
      $region19: #{branch_gcn_forward.2} parent=11 // pred_region
        _
      $region20: #{branch_gcn_forward.2} parent=11 // pred_fallthru
        _
      // Predicated region
      $region21: #{branch_gcn_forward.2} parent=11 // pred_check
        %p170 = pneg %p102
      $region22: #{branch_gcn_forward.2} parent=11 // pred_check_branch
        %172 = sbr.rel (%p170) target = $region24
      $region23: #{branch_gcn_forward.2} parent=11 // pred_region
        _
      $region24: #{branch_gcn_forward.2} parent=11 // pred_fallthru
        _
      // Predicated region
      $region25: #{branch_gcn_forward.2} parent=11 // pred_check
        %p173 = pneg %p123
      $region26: #{branch_gcn_forward.2} parent=11 // pred_check_branch
        %175 = sbr.rel (%p173) target = $region28
      $region27: #{branch_gcn_forward.2} parent=11 // pred_region
        _
      $region28: #{branch_gcn_forward.2} parent=11 // pred_fallthru
        _
    $region12: #{branch_gcn_forward.2} parent=5 // pred_fallthru
      _
    %p176 = scmp.lt.s32.totalorder %s13, 2
    // Predicated region
    $region29: #{branch_gcn_forward.2} parent=5 // pred_check
      %p177 = pneg %p176
    $region30: #{branch_gcn_forward.2} parent=5 // pred_check_branch
      %179 = sbr.rel (%p177) target = $region32
    $region31: #{branch_gcn_forward.2} parent=5 // pred_region
      // Predicated region
      $region33: #{branch_gcn_forward.2} parent=31 // pred_check
        %p180 = pneg %p33
      $region34: #{branch_gcn_forward.2} parent=31 // pred_check_branch
        %182 = sbr.rel (%p180) target = $region36
      $region35: #{branch_gcn_forward.2} parent=31 // pred_region
        %s183 = ssub.s32 1, %s13
        %s184 = smul.u32 128, %s183
        %p185 = scmp.lt.s32.totalorder %s13, 0
        %s186 = scalar_select %p185, %s13, 0
        %s187 = smul.addr %s186, 8
        %s188 = scalar_lea.vmem %s4, %s187
        %s189 = ssub.s32 1, %s13
        %s190 = smul.u32 128, %s189
      $region36: #{branch_gcn_forward.2} parent=31 // pred_fallthru
        _
    $region32: #{branch_gcn_forward.2} parent=5 // pred_fallthru
      _
    %p191 = scmp.le.s32.totalorder 1, %s13
    %p192 = scmp.lt.s32.totalorder %s13, 3
    %p193 = pnand %p191, %p192
    %p194 = pneg %p193
    // Predicated region
    $region37: #{branch_gcn_forward.2} parent=5 // pred_check
      _
    $region38: #{branch_gcn_forward.2} parent=5 // pred_check_branch
      %196 = sbr.rel (%p193) target = $region40
    $region39: #{branch_gcn_forward.2} parent=5 // pred_region
      #allocation7 [shape = 'u8[4096]{0}', space=vmem, size = 0x1000, dematerialized = true, scoped, tag = 'FusionAdapter Buffer %fusion.1 = f32[16,64]{1,0:T(8,128)} fusion(%param_4.1, %param_5), kind=kLoop, calls=%fused_computation.1.clone, metadata={op_name="jit(branch_gcn_forward)/jit(_pad)/pad" stack_frame_id=1}']
      %s197 = ssub.s32 %s13, 1
      %s198 = ssub.s32 1, %s18
      %s199 = smul.u32 128, %s198
      %p200 = scmp.lt.s32.totalorder %s18, 0
      %s201 = scalar_select %p200, %s18, 0
      %s202 = smul.addr %s201, 8
      %s203 = scalar_lea.vmem %s4, %s202
      %p204 = pneg %p39
      %p205 = pneg %p36
      %p206 = pneg %p60
      %p207 = pneg %p57
      %p208 = pneg %p81
      %p209 = pneg %p78
      %p210 = pneg %p102
      %p211 = pneg %p99
      %p212 = pneg %p123
      %p213 = pneg %p120
      %p214 = pneg %p149
      %p215 = pneg %p146
      %p216 = scmp.lt.s32.totalorder %s18, 1
      %s217 = scalar_select %p216, %s18, 1
      %s218 = smul.addr %s217, 8
      %s219 = scalar_lea.vmem %s6, %s218
      %s220 = ssub.s32 1, %s18
      %s221 = smul.u32 128, %s220
      %p222 = scmp.lt.s32.totalorder %s18, 0
      %s223 = scalar_select %p222, %s18, 0
      %s224 = smul.addr %s223, 8
      %s225 = scalar_lea.vmem %s4, %s224
      %s226 = ssub.s32 1, %s18
      %s227 = smul.u32 128, %s226
      %p228 = scmp.lt.s32.totalorder %s18, 1
      %s229 = scalar_select %p228, %s18, 1
      %s230 = smul.addr %s229, 8
      %s231 = scalar_lea.vmem %s6, %s230
      %s232 = ssub.s32 0, %s18
      %p233 = scmp.lt.s32.totalorder %s232, 0
      %s234 = scalar_select %p233, 0, 255
      %v235 = vld [vmem:[%s225] sm:%s234]
      %s236 = ssub.s32 0, %s18
      %v237 = vstv %s236
      %vm238 = vcmp.lt.s32.totalorder %v237, 0
      %v239 = vsel %vm238, %v11, %v235
      %v240 = vlaneseq
      %v241 = vand.u32 %v240, 127
      %vm243 = vcmp.lt.s32.totalorder %v241, 64
      %v244 = vsel %vm243, %v239, %v11
      %246 = vst [vmem:[#allocation7] sm:$0xff] %v244
      %v247 = vld [vmem:[#allocation7] sm:$0xff]
      %v248 = vld [vmem:[%s0] sm:$0xff]
      %v249 = vld [vmem:[%s0 + $0x8] sm:$0xff]
      %v250 = vld [vmem:[%s0 + $0x10] sm:$0xff]
      %v251 = vld [vmem:[%s0 + $0x18] sm:$0xff]
      %v252 = vld [vmem:[%s0 + $0x20] sm:$0xff]
      %v253 = vld [vmem:[%s0 + $0x28] sm:$0xff]
      %v254 = vld [vmem:[%s0 + $0x30] sm:$0xff]
      %v255 = vld [vmem:[%s0 + $0x38] sm:$0xff]
      %v256 = vld [vmem:[%s1] sm:$0x1]
      %v258 = vlaneseq
      %v259 = vshrl.u32 %v258, 7
      %v260 = vsub.s32 0, %v259
      %v261 = vrot.slane %v256, %v260
      %vm263 = vcmask 523264
      %v265 = vsel %vm263, %v247, 0
      %267 = vmatprep.subr.mxu0 0.0
      %268 = vmatpush1.msra.mxu0 %v248
      %269 = vmatprep.subr.mxu0 0.0
      %270 = vmatpush1.msra.mxu0 %v249
      %271 = vmatprep.subr.mxu0 0.0
      %272 = vmatpush1.msra.mxu0 %v250
      %273 = vmatprep.subr.mxu0 0.0
      %274 = vmatpush1.msra.mxu0 %v251
      %275 = vmatprep.subr.mxu0 0.0
      %276 = vmatpush1.msra.mxu0 %v252
      %277 = vmatprep.subr.mxu0 0.0
      %278 = vmatpush1.msra.mxu0 %v253
      %279 = vmatprep.subr.mxu0 0.0
      %280 = vmatpush1.msra.mxu0 %v254
      %281 = vmatprep.subr.mxu0 0.0
      %282 = vmatpush1.msra.mxu0 %v255
      %283 = vmatprep.subr.mxu0 0.0
      %284 = vmatpush1.msra.mxu0 0.0
      %285 = vmatprep.subr.mxu0 0.0
      %286 = vmatpush1.msra.mxu0 0.0
      %287 = vmatprep.subr.mxu0 0.0
      %288 = vmatpush1.msra.mxu0 0.0
      %289 = vmatprep.subr.mxu0 0.0
      %290 = vmatpush1.msra.mxu0 0.0
      %291 = vmatprep.subr.mxu0 0.0
      %292 = vmatpush1.msra.mxu0 0.0
      %293 = vmatprep.subr.mxu0 0.0
      %294 = vmatpush1.msra.mxu0 0.0
      %295 = vmatprep.subr.mxu0 0.0
      %296 = vmatpush1.msra.mxu0 0.0
      %297 = vmatprep.subr.mxu0 0.0
      %298 = vmatpush1.msra.mxu0 0.0
      %299 = vmatprep.subr.mxu0 0.0
      %300 = vmatpush1.msra.mxu0 0.0
      %301 = vmatprep.subr.mxu0 0.0
      %302 = vmatpush1.msra.mxu0 0.0
      %303 = vmatprep.subr.mxu0 0.0
      %304 = vmatpush1.msra.mxu0 0.0
      %305 = vmatprep.subr.mxu0 0.0
      %306 = vmatpush1.msra.mxu0 0.0
      %307 = vmatprep.subr.mxu0 0.0
      %308 = vmatpush1.msra.mxu0 0.0
      %309 = vmatprep.subr.mxu0 0.0
      %310 = vmatpush1.msra.mxu0 0.0
      %311 = vmatprep.subr.mxu0 0.0
      %312 = vmatpush1.msra.mxu0 0.0
      %313 = vmatprep.subr.mxu0 0.0
      %314 = vmatpush1.msra.mxu0 0.0
      %315 = vmatprep.subr.mxu0 0.0
      %316 = vmatpush1.msra.mxu0 0.0
      %317 = vmatprep.subr.mxu0 0.0
      %318 = vmatpush1.msra.mxu0 0.0
      %319 = vmatprep.subr.mxu0 0.0
      %320 = vmatpush1.msra.mxu0 0.0
      %321 = vmatprep.subr.mxu0 0.0
      %322 = vmatpush1.msra.mxu0 0.0
      %323 = vmatprep.subr.mxu0 0.0
      %324 = vmatpush1.msra.mxu0 0.0
      %325 = vmatprep.subr.mxu0 0.0
      %326 = vmatpush1.msra.mxu0 0.0
      %327 = vmatprep.subr.mxu0 0.0
      %328 = vmatpush1.msra.mxu0 0.0
      %329 = vmatprep.subr.mxu0 0.0
      %330 = vmatpush1.msra.mxu0 0.0
      %331 = vmatprep.mubr.f32.mxu0 0.0
      %332 = vmatmul.mubr.f32.gmra.mrb[0].mxu0 %v265
      %v333 = vpop.f32.mrb[0].mxu0
      %v334 = vadd.f32 %v261, %v333
      %v335 = vpop.f32.mrb[0].mxu0
      %336 = vdwg.mxu0
      %v337 = vmax.f32 %v334, 0.0
      %v338 = vld [vmem:[%s2] sm:$0xff]
      %v339 = vld [vmem:[%s2 + $0x8] sm:$0xff]
      %v340 = vld [vmem:[%s2 + $0x10] sm:$0xff]
      %v341 = vld [vmem:[%s2 + $0x18] sm:$0xff]
      %v342 = vld [vmem:[%s2 + $0x20] sm:$0xff]
      %v343 = vld [vmem:[%s2 + $0x28] sm:$0xff]
      %v344 = vld [vmem:[%s2 + $0x30] sm:$0xff]
      %v345 = vld [vmem:[%s2 + $0x38] sm:$0xff]
      %v346 = vld [vmem:[%s2 + $0x40] sm:$0xff]
      %v347 = vld [vmem:[%s2 + $0x48] sm:$0xff]
      %v348 = vld [vmem:[%s2 + $0x50] sm:$0xff]
      %v349 = vld [vmem:[%s2 + $0x58] sm:$0xff]
      %v350 = vld [vmem:[%s2 + $0x60] sm:$0xff]
      %v351 = vld [vmem:[%s2 + $0x68] sm:$0xff]
      %v352 = vld [vmem:[%s2 + $0x70] sm:$0xff]
      %v353 = vld [vmem:[%s2 + $0x78] sm:$0xff]
      %v354 = vld [vmem:[%s3] sm:$0x1]
      %v356 = vlaneseq
      %v357 = vshrl.u32 %v356, 7
      %v358 = vsub.s32 0, %v357
      %v359 = vrot.slane %v354, %v358
      %361 = vmatprep.subr.mxu0 0.0
      %362 = vmatpush1.msra.mxu0 %v338
      %363 = vmatprep.subr.mxu0 0.0
      %364 = vmatpush1.msra.mxu0 %v339
      %365 = vmatprep.subr.mxu0 0.0
      %366 = vmatpush1.msra.mxu0 %v340
      %367 = vmatprep.subr.mxu0 0.0
      %368 = vmatpush1.msra.mxu0 %v341
      %369 = vmatprep.subr.mxu0 0.0
      %370 = vmatpush1.msra.mxu0 %v342
      %371 = vmatprep.subr.mxu0 0.0
      %372 = vmatpush1.msra.mxu0 %v343
      %373 = vmatprep.subr.mxu0 0.0
      %374 = vmatpush1.msra.mxu0 %v344
      %375 = vmatprep.subr.mxu0 0.0
      %376 = vmatpush1.msra.mxu0 %v345
      %377 = vmatprep.subr.mxu0 0.0
      %378 = vmatpush1.msra.mxu0 %v346
      %379 = vmatprep.subr.mxu0 0.0
      %380 = vmatpush1.msra.mxu0 %v347
      %381 = vmatprep.subr.mxu0 0.0
      %382 = vmatpush1.msra.mxu0 %v348
      %383 = vmatprep.subr.mxu0 0.0
      %384 = vmatpush1.msra.mxu0 %v349
      %385 = vmatprep.subr.mxu0 0.0
      %386 = vmatpush1.msra.mxu0 %v350
      %387 = vmatprep.subr.mxu0 0.0
      %388 = vmatpush1.msra.mxu0 %v351
      %389 = vmatprep.subr.mxu0 0.0
      %390 = vmatpush1.msra.mxu0 %v352
      %391 = vmatprep.subr.mxu0 0.0
      %392 = vmatpush1.msra.mxu0 %v353
      %393 = vmatprep.subr.mxu0 0.0
      %394 = vmatpush1.msra.mxu0 0.0
      %395 = vmatprep.subr.mxu0 0.0
      %396 = vmatpush1.msra.mxu0 0.0
      %397 = vmatprep.subr.mxu0 0.0
      %398 = vmatpush1.msra.mxu0 0.0
      %399 = vmatprep.subr.mxu0 0.0
      %400 = vmatpush1.msra.mxu0 0.0
      %401 = vmatprep.subr.mxu0 0.0
      %402 = vmatpush1.msra.mxu0 0.0
      %403 = vmatprep.subr.mxu0 0.0
      %404 = vmatpush1.msra.mxu0 0.0
      %405 = vmatprep.subr.mxu0 0.0
      %406 = vmatpush1.msra.mxu0 0.0
      %407 = vmatprep.subr.mxu0 0.0
      %408 = vmatpush1.msra.mxu0 0.0
      %409 = vmatprep.subr.mxu0 0.0
      %410 = vmatpush1.msra.mxu0 0.0
      %411 = vmatprep.subr.mxu0 0.0
      %412 = vmatpush1.msra.mxu0 0.0
      %413 = vmatprep.subr.mxu0 0.0
      %414 = vmatpush1.msra.mxu0 0.0
      %415 = vmatprep.subr.mxu0 0.0
      %416 = vmatpush1.msra.mxu0 0.0
      %417 = vmatprep.subr.mxu0 0.0
      %418 = vmatpush1.msra.mxu0 0.0
      %419 = vmatprep.subr.mxu0 0.0
      %420 = vmatpush1.msra.mxu0 0.0
      %421 = vmatprep.subr.mxu0 0.0
      %422 = vmatpush1.msra.mxu0 0.0
      %423 = vmatprep.subr.mxu0 0.0
      %424 = vmatpush1.msra.mxu0 0.0
      %425 = vmatprep.mubr.f32.mxu0 0.0
      %426 = vmatmul.mubr.f32.gmra.mrb[0].mxu0 %v337
      %v427 = vpop.f32.mrb[0].mxu0
      %v428 = vadd.f32 %v359, %v427
      %v429 = vpop.f32.mrb[0].mxu0
      %430 = vdwg.mxu0
      %v431 = vadd.f32 %v428, %v337
      %v432 = vmax.f32 %v431, 0.0
      %s433 = scalar_lea.vmem %s2, 128
      %v434 = vld [vmem:[%s433] sm:$0xff]
      %v435 = vld [vmem:[%s433 + $0x8] sm:$0xff]
      %v436 = vld [vmem:[%s433 + $0x10] sm:$0xff]
      %v437 = vld [vmem:[%s433 + $0x18] sm:$0xff]
      %v438 = vld [vmem:[%s433 + $0x20] sm:$0xff]
      %v439 = vld [vmem:[%s433 + $0x28] sm:$0xff]
      %v440 = vld [vmem:[%s433 + $0x30] sm:$0xff]
      %v441 = vld [vmem:[%s433 + $0x38] sm:$0xff]
      %v442 = vld [vmem:[%s433 + $0x40] sm:$0xff]
      %v443 = vld [vmem:[%s433 + $0x48] sm:$0xff]
      %v444 = vld [vmem:[%s433 + $0x50] sm:$0xff]
      %v445 = vld [vmem:[%s433 + $0x58] sm:$0xff]
      %v446 = vld [vmem:[%s433 + $0x60] sm:$0xff]
      %v447 = vld [vmem:[%s433 + $0x68] sm:$0xff]
      %v448 = vld [vmem:[%s433 + $0x70] sm:$0xff]
      %v449 = vld [vmem:[%s433 + $0x78] sm:$0xff]
      %s450 = scalar_lea.vmem %s3, 1
      %v451 = vld [vmem:[%s450] sm:$0x1]
      %v453 = vlaneseq
      %v454 = vshrl.u32 %v453, 7
      %v455 = vsub.s32 0, %v454
      %v456 = vrot.slane %v451, %v455
      %458 = vmatprep.subr.mxu0 0.0
      %459 = vmatpush1.msra.mxu0 %v434
      %460 = vmatprep.subr.mxu0 0.0
      %461 = vmatpush1.msra.mxu0 %v435
      %462 = vmatprep.subr.mxu0 0.0
      %463 = vmatpush1.msra.mxu0 %v436
      %464 = vmatprep.subr.mxu0 0.0
      %465 = vmatpush1.msra.mxu0 %v437
      %466 = vmatprep.subr.mxu0 0.0
      %467 = vmatpush1.msra.mxu0 %v438
      %468 = vmatprep.subr.mxu0 0.0
      %469 = vmatpush1.msra.mxu0 %v439
      %470 = vmatprep.subr.mxu0 0.0
      %471 = vmatpush1.msra.mxu0 %v440
      %472 = vmatprep.subr.mxu0 0.0
      %473 = vmatpush1.msra.mxu0 %v441
      %474 = vmatprep.subr.mxu0 0.0
      %475 = vmatpush1.msra.mxu0 %v442
      %476 = vmatprep.subr.mxu0 0.0
      %477 = vmatpush1.msra.mxu0 %v443
      %478 = vmatprep.subr.mxu0 0.0
      %479 = vmatpush1.msra.mxu0 %v444
      %480 = vmatprep.subr.mxu0 0.0
      %481 = vmatpush1.msra.mxu0 %v445
      %482 = vmatprep.subr.mxu0 0.0
      %483 = vmatpush1.msra.mxu0 %v446
      %484 = vmatprep.subr.mxu0 0.0
      %485 = vmatpush1.msra.mxu0 %v447
      %486 = vmatprep.subr.mxu0 0.0
      %487 = vmatpush1.msra.mxu0 %v448
      %488 = vmatprep.subr.mxu0 0.0
      %489 = vmatpush1.msra.mxu0 %v449
      %490 = vmatprep.subr.mxu0 0.0
      %491 = vmatpush1.msra.mxu0 0.0
      %492 = vmatprep.subr.mxu0 0.0
      %493 = vmatpush1.msra.mxu0 0.0
      %494 = vmatprep.subr.mxu0 0.0
      %495 = vmatpush1.msra.mxu0 0.0
      %496 = vmatprep.subr.mxu0 0.0
      %497 = vmatpush1.msra.mxu0 0.0
      %498 = vmatprep.subr.mxu0 0.0
      %499 = vmatpush1.msra.mxu0 0.0
      %500 = vmatprep.subr.mxu0 0.0
      %501 = vmatpush1.msra.mxu0 0.0
      %502 = vmatprep.subr.mxu0 0.0
      %503 = vmatpush1.msra.mxu0 0.0
      %504 = vmatprep.subr.mxu0 0.0
      %505 = vmatpush1.msra.mxu0 0.0
      %506 = vmatprep.subr.mxu0 0.0
      %507 = vmatpush1.msra.mxu0 0.0
      %508 = vmatprep.subr.mxu0 0.0
      %509 = vmatpush1.msra.mxu0 0.0
      %510 = vmatprep.subr.mxu0 0.0
      %511 = vmatpush1.msra.mxu0 0.0
      %512 = vmatprep.subr.mxu0 0.0
      %513 = vmatpush1.msra.mxu0 0.0
      %514 = vmatprep.subr.mxu0 0.0
      %515 = vmatpush1.msra.mxu0 0.0
      %516 = vmatprep.subr.mxu0 0.0
      %517 = vmatpush1.msra.mxu0 0.0
      %518 = vmatprep.subr.mxu0 0.0
      %519 = vmatpush1.msra.mxu0 0.0
      %520 = vmatprep.subr.mxu0 0.0
      %521 = vmatpush1.msra.mxu0 0.0
      %522 = vmatprep.mubr.f32.mxu0 0.0
      %523 = vmatmul.mubr.f32.gmra.mrb[0].mxu0 %v432
      %v524 = vpop.f32.mrb[0].mxu0
      %v525 = vadd.f32 %v456, %v524
      %v526 = vpop.f32.mrb[0].mxu0
      %527 = vdwg.mxu0
      %v528 = vadd.f32 %v525, %v432
      %v529 = vmax.f32 %v528, 0.0
      %s530 = scalar_lea.vmem %s2, 256
      %v531 = vld [vmem:[%s530] sm:$0xff]
      %v532 = vld [vmem:[%s530 + $0x8] sm:$0xff]
      %v533 = vld [vmem:[%s530 + $0x10] sm:$0xff]
      %v534 = vld [vmem:[%s530 + $0x18] sm:$0xff]
      %v535 = vld [vmem:[%s530 + $0x20] sm:$0xff]
      %v536 = vld [vmem:[%s530 + $0x28] sm:$0xff]
      %v537 = vld [vmem:[%s530 + $0x30] sm:$0xff]
      %v538 = vld [vmem:[%s530 + $0x38] sm:$0xff]
      %v539 = vld [vmem:[%s530 + $0x40] sm:$0xff]
      %v540 = vld [vmem:[%s530 + $0x48] sm:$0xff]
      %v541 = vld [vmem:[%s530 + $0x50] sm:$0xff]
      %v542 = vld [vmem:[%s530 + $0x58] sm:$0xff]
      %v543 = vld [vmem:[%s530 + $0x60] sm:$0xff]
      %v544 = vld [vmem:[%s530 + $0x68] sm:$0xff]
      %v545 = vld [vmem:[%s530 + $0x70] sm:$0xff]
      %v546 = vld [vmem:[%s530 + $0x78] sm:$0xff]
      %s547 = scalar_lea.vmem %s3, 2
      %v548 = vld [vmem:[%s547] sm:$0x1]
      %v550 = vlaneseq
      %v551 = vshrl.u32 %v550, 7
      %v552 = vsub.s32 0, %v551
      %v553 = vrot.slane %v548, %v552
      %555 = vmatprep.subr.mxu0 0.0
      %556 = vmatpush1.msra.mxu0 %v531
      %557 = vmatprep.subr.mxu0 0.0
      %558 = vmatpush1.msra.mxu0 %v532
      %559 = vmatprep.subr.mxu0 0.0
      %560 = vmatpush1.msra.mxu0 %v533
      %561 = vmatprep.subr.mxu0 0.0
      %562 = vmatpush1.msra.mxu0 %v534
      %563 = vmatprep.subr.mxu0 0.0
      %564 = vmatpush1.msra.mxu0 %v535
      %565 = vmatprep.subr.mxu0 0.0
      %566 = vmatpush1.msra.mxu0 %v536
      %567 = vmatprep.subr.mxu0 0.0
      %568 = vmatpush1.msra.mxu0 %v537
      %569 = vmatprep.subr.mxu0 0.0
      %570 = vmatpush1.msra.mxu0 %v538
      %571 = vmatprep.subr.mxu0 0.0
      %572 = vmatpush1.msra.mxu0 %v539
      %573 = vmatprep.subr.mxu0 0.0
      %574 = vmatpush1.msra.mxu0 %v540
      %575 = vmatprep.subr.mxu0 0.0
      %576 = vmatpush1.msra.mxu0 %v541
      %577 = vmatprep.subr.mxu0 0.0
      %578 = vmatpush1.msra.mxu0 %v542
      %579 = vmatprep.subr.mxu0 0.0
      %580 = vmatpush1.msra.mxu0 %v543
      %581 = vmatprep.subr.mxu0 0.0
      %582 = vmatpush1.msra.mxu0 %v544
      %583 = vmatprep.subr.mxu0 0.0
      %584 = vmatpush1.msra.mxu0 %v545
      %585 = vmatprep.subr.mxu0 0.0
      %586 = vmatpush1.msra.mxu0 %v546
      %587 = vmatprep.subr.mxu0 0.0
      %588 = vmatpush1.msra.mxu0 0.0
      %589 = vmatprep.subr.mxu0 0.0
      %590 = vmatpush1.msra.mxu0 0.0
      %591 = vmatprep.subr.mxu0 0.0
      %592 = vmatpush1.msra.mxu0 0.0
      %593 = vmatprep.subr.mxu0 0.0
      %594 = vmatpush1.msra.mxu0 0.0
      %595 = vmatprep.subr.mxu0 0.0
      %596 = vmatpush1.msra.mxu0 0.0
      %597 = vmatprep.subr.mxu0 0.0
      %598 = vmatpush1.msra.mxu0 0.0
      %599 = vmatprep.subr.mxu0 0.0
      %600 = vmatpush1.msra.mxu0 0.0
      %601 = vmatprep.subr.mxu0 0.0
      %602 = vmatpush1.msra.mxu0 0.0
      %603 = vmatprep.subr.mxu0 0.0
      %604 = vmatpush1.msra.mxu0 0.0
      %605 = vmatprep.subr.mxu0 0.0
      %606 = vmatpush1.msra.mxu0 0.0
      %607 = vmatprep.subr.mxu0 0.0
      %608 = vmatpush1.msra.mxu0 0.0
      %609 = vmatprep.subr.mxu0 0.0
      %610 = vmatpush1.msra.mxu0 0.0
      %611 = vmatprep.subr.mxu0 0.0
      %612 = vmatpush1.msra.mxu0 0.0
      %613 = vmatprep.subr.mxu0 0.0
      %614 = vmatpush1.msra.mxu0 0.0
      %615 = vmatprep.subr.mxu0 0.0
      %616 = vmatpush1.msra.mxu0 0.0
      %617 = vmatprep.subr.mxu0 0.0
      %618 = vmatpush1.msra.mxu0 0.0
      %619 = vmatprep.mubr.f32.mxu0 0.0
      %620 = vmatmul.mubr.f32.gmra.mrb[0].mxu0 %v529
      %v621 = vpop.f32.mrb[0].mxu0
      %v622 = vadd.f32 %v553, %v621
      %v623 = vpop.f32.mrb[0].mxu0
      %624 = vdwg.mxu0
      %v625 = vadd.f32 %v622, %v529
      %v626 = vmax.f32 %v625, 0.0
      %627 = vst [vmem:[%s231] sm:$0xff] %v626
      %p628 = scmp.lt.s32.totalorder %s18, 1
      %s629 = scalar_select %p628, %s18, 1
      %s630 = smul.addr %s629, 8
      %s631 = scalar_lea.vmem %s6, %s630
      // Predicated region
      $region41: #{branch_gcn_forward.2} parent=39 // pred_check
        %p632 = pneg %p146
      $region42: #{branch_gcn_forward.2} parent=39 // pred_check_branch
        %634 = sbr.rel (%p632) target = $region44
      $region43: #{branch_gcn_forward.2} parent=39 // pred_region
        _
      $region44: #{branch_gcn_forward.2} parent=39 // pred_fallthru
        _
    $region40: #{branch_gcn_forward.2} parent=5 // pred_fallthru
      _
    %p635 = scmp.le.s32.totalorder 2, %s13
    // Predicated region
    $region45: #{branch_gcn_forward.2} parent=5 // pred_check
      %p636 = pneg %p635
    $region46: #{branch_gcn_forward.2} parent=5 // pred_check_branch
      %638 = sbr.rel (%p636) target = $region48
    $region47: #{branch_gcn_forward.2} parent=5 // pred_region
      %s639 = ssub.s32 %s13, 2
      // Predicated region
      $region49: #{branch_gcn_forward.2} parent=47 // pred_check
        %p640 = pneg %p152
      $region50: #{branch_gcn_forward.2} parent=47 // pred_check_branch
        %642 = sbr.rel (%p640) target = $region52
      $region51: #{branch_gcn_forward.2} parent=47 // pred_region
        %p643 = scmp.lt.s32.totalorder %s19, 1
        %s644 = scalar_select %p643, %s19, 1
        %s645 = smul.addr %s644, 8
        %s646 = scalar_lea.vmem %s6, %s645
      $region52: #{branch_gcn_forward.2} parent=47 // pred_fallthru
        _
    $region48: #{branch_gcn_forward.2} parent=5 // pred_fallthru
      _
  $region6: #{branch_gcn_forward.2} parent=0 // loop_footer
    %s17 = sadd.s32 1, %s13
  $region7: #{branch_gcn_forward.2} parent=0 // loop_footer_branch
    %12 = sbr.rel target = $region3
  $region8: #{branch_gcn_forward.2} parent=0 // loop_exit
    _

</llo_original>
